<compile_context>
chip_gen: v5e
topology: v5e:2x2
jax: 0.10.0
libtpu: 0.0.40
codegen_flags: <defaults>
</compile_context>

<pallas_src>
import functools

import jax
import jax.numpy as jnp
from jax import lax
from jax.experimental import pallas as pl
from jax.experimental.pallas import tpu as pltpu


def _round_up(x: int, m: int) -> int:
    return ((x + m - 1) // m) * m


def _matmul_bias_relu(x_tile, w_tile, b_tile):
    """x:(tm,tk) @ w:(tn,tk)^T + b:(1,tn), relu, in f32."""
    acc = lax.dot_general(
        x_tile, w_tile,
        dimension_numbers=(((1,), (1,)), ((), ())),
        preferred_element_type=jnp.float32,
    )
    return jnp.maximum(acc + b_tile, 0.0)


def linear_block_kernel_single_k(x_ref, w_ref, b_ref, o_ref):
    """Single-K-step path: no accumulator scratch, write output tile directly."""
    o_ref[...] = _matmul_bias_relu(x_ref[...], w_ref[...], b_ref[...]).astype(o_ref.dtype)


def linear_block_kernel_multi_k(x_ref, w_ref, b_ref, o_ref, acc_ref):
    """x:(tm,tk)  w:(tn,tk)  b:(1,tn)  o:(tm,tn)  acc:(tm,tn) f32."""
    k = pl.program_id(2)

    @pl.when(k == 0)
    def _():
        acc_ref[...] = jnp.zeros_like(acc_ref)

    acc_ref[...] += lax.dot_general(
        x_ref[...], w_ref[...],
        dimension_numbers=(((1,), (1,)), ((), ())),
        preferred_element_type=jnp.float32,
    )

    # Bias + relu epilogue only once per (i, j) output tile, on the last k step.
    @pl.when(k == pl.num_programs(2) - 1)
    def _():
        y = acc_ref[...] + b_ref[...]          # broadcast (1, tn) over rows
        o_ref[...] = jnp.maximum(y, 0.0).astype(o_ref.dtype)


@functools.partial(jax.jit, static_argnames=("tm", "tn", "tk"))
def linear_block(x, weight, bias, *, tm=256, tn=256, tk=512):
    """x: (N, C, in_len); weight: (out_len, in_len); bias: (out_len,)."""
    N, C, L = x.shape
    out_len = weight.shape[0]
    M = N * C

    # Clamp tiles to the (padded) problem so tiny shapes still use one small tile.
    tm = min(tm, _round_up(M, 8))
    tn = min(tn, _round_up(out_len, 128))
    tk = min(tk, _round_up(L, 128))

    Mp = _round_up(M, tm)
    Op = _round_up(out_len, tn)
    Kp = _round_up(L, tk)

    xm = x.reshape(M, L)
    if (Mp, Kp) != (M, L):
        xm = jnp.pad(xm, ((0, Mp - M), (0, Kp - L)))            # zero K-pad: no effect
    wp = weight
    if (Op, Kp) != (out_len, L):
        wp = jnp.pad(weight, ((0, Op - out_len), (0, Kp - L)))  # padded outputs sliced off
    b2 = bias.reshape(1, out_len)
    if Op != out_len:
        b2 = jnp.pad(b2, ((0, 0), (0, Op - out_len)))

    nk = Kp // tk
    grid = (Mp // tm, Op // tn, nk)
    itemsize = jnp.dtype(xm.dtype).itemsize

    in_specs = [
        pl.BlockSpec((tm, tk), lambda i, j, k: (i, k)),   # x tile
        pl.BlockSpec((tn, tk), lambda i, j, k: (j, k)),   # W tile, (out,in) layout
        pl.BlockSpec((1, tn), lambda i, j, k: (0, j)),    # bias tile
    ]
    out_spec = pl.BlockSpec((tm, tn), lambda i, j, k: (i, j))

    if nk == 1:
        kernel = linear_block_kernel_single_k
        scratch_shapes = []
    else:
        kernel = linear_block_kernel_multi_k
        scratch_shapes = [pltpu.VMEM((tm, tn), jnp.float32)]

    out = pl.pallas_call(
        kernel,
        out_shape=jax.ShapeDtypeStruct((Mp, Op), x.dtype),
        grid_spec=pltpu.PrefetchScalarGridSpec(
            num_scalar_prefetch=0,
            grid=grid,
            in_specs=in_specs,
            out_specs=out_spec,
            scratch_shapes=scratch_shapes,
        ),
        compiler_params=pltpu.CompilerParams(
            dimension_semantics=("parallel", "parallel", "arbitrary"),
            vmem_limit_bytes=64 << 20,
        ),
        cost_estimate=pl.CostEstimate(
            flops=2 * Mp * Op * Kp,
            transcendentals=0,
            bytes_accessed=(Mp * Kp + Op * Kp + Mp * Op) * itemsize,
        ),
    )(xm, wp, b2)

    return out[:M, :out_len].reshape(N, C, out_len)


if __name__ == "__main__":
    # Small shapes implied by forward(x: (N, C, L)): N=2, C=4, in_len=32, out_len=64.
    N, C, in_len, out_len = 2, 4, 32, 64

    key = jax.random.PRNGKey(0)
    kx, kw, kb = jax.random.split(key, 3)

    x = jax.random.normal(kx, (N, C, in_len), dtype=jnp.float32)
    # nn.Linear-shaped params: weight (out, in), bias (out,)
    bound = 1.0 / (in_len ** 0.5)
    weight = jax.random.uniform(kw, (out_len, in_len), jnp.float32, -bound, bound)
    bias = jax.random.uniform(kb, (out_len,), jnp.float32, -bound, bound)

    out = jax.block_until_ready(linear_block(x, weight, bias))

    # Reference check (plain JAX): relu(x @ W^T + b)
    ref = jnp.maximum(jnp.einsum("ncl,ol->nco", x, weight) + bias, 0.0)
    assert out.shape == (N, C, out_len)
    assert jnp.allclose(out, ref, atol=1e-5, rtol=1e-5)

    # A larger, tile-exercising shape to hit the multi-K accumulator path.
    N2, C2, in2, out2 = 4, 160, 1280, 512         # M = 640 -> multiple tiles on every axis
    kx2, kw2, kb2 = jax.random.split(jax.random.PRNGKey(1), 3)
    x2 = jax.random.normal(kx2, (N2, C2, in2), dtype=jnp.float32)
    w2 = jax.random.uniform(kw2, (out2, in2), jnp.float32, -0.05, 0.05)
    b2 = jax.random.uniform(kb2, (out2,), jnp.float32, -0.05, 0.05)
    out_big = jax.block_until_ready(linear_block(x2, w2, b2))
    ref_big = jnp.maximum(jnp.einsum("ncl,ol->nco", x2, w2) + b2, 0.0)
    assert jnp.allclose(out_big, ref_big, atol=1e-4, rtol=1e-4)

    print("KERNEL_OK")
</pallas_src>

<mosaic_0001>
module attributes {stable_mosaic.version = 11 : i64} {
  func.func @linear_block_kernel_single_k(%arg0: i32, %arg1: i32, %arg2: i32, %arg3: memref<8x128xf32, #tpu.memory_space<vmem>>, %arg4: memref<128x128xf32, #tpu.memory_space<vmem>>, %arg5: memref<1x128xf32, #tpu.memory_space<vmem>>, %arg6: memref<8x128xf32, #tpu.memory_space<vmem>>) attributes {dimension_semantics = [#tpu.dimension_semantics<parallel>, #tpu.dimension_semantics<parallel>, #tpu.dimension_semantics<arbitrary>], iteration_bounds = array<i64: 1, 1, 1>, scalar_prefetch = 0 : i64, scratch_operands = 0 : i64, tpu.core_type = #tpu.core_type<tc>, window_params = [{transform_indices = @transform_0, window_bounds = array<i64: 8, 128>}, {transform_indices = @transform_1, window_bounds = array<i64: 128, 128>}, {transform_indices = @transform_2, window_bounds = array<i64: 1, 128>}, {transform_indices = @transform_3, window_bounds = array<i64: 8, 128>}]} {
    %c0 = arith.constant 0 : index
    %c0_0 = arith.constant 0 : index
    %0 = vector.load %arg3[%c0, %c0_0] : memref<8x128xf32, #tpu.memory_space<vmem>>, vector<8x128xf32>
    %c0_1 = arith.constant 0 : index
    %c0_2 = arith.constant 0 : index
    %1 = vector.load %arg4[%c0_1, %c0_2] : memref<128x128xf32, #tpu.memory_space<vmem>>, vector<128x128xf32>
    %c0_3 = arith.constant 0 : index
    %c0_4 = arith.constant 0 : index
    %2 = vector.load %arg5[%c0_3, %c0_4] : memref<1x128xf32, #tpu.memory_space<vmem>>, vector<1x128xf32>
    %cst = arith.constant dense<0.000000e+00> : vector<8x128xf32>
    %3 = tpu.matmul %0, %1, %cst {dimension_numbers = #tpu.dot_dimension_numbers<[1], [1], [0], [0], [0, 0, 1, 0], [], []>} : vector<8x128xf32>, vector<128x128xf32>, vector<8x128xf32> -> vector<8x128xf32>
    %4 = vector.broadcast %2 : vector<1x128xf32> to vector<8x128xf32>
    %5 = arith.addf %3, %4 : vector<8x128xf32>
    %cst_5 = arith.constant 0.000000e+00 : f32
    %6 = vector.broadcast %cst_5 : f32 to vector<8x128xf32>
    %7 = arith.maximumf %5, %6 : vector<8x128xf32>
    %c0_6 = arith.constant 0 : index
    %c0_7 = arith.constant 0 : index
    %8 = vector.load %arg6[%c0_6, %c0_7] : memref<8x128xf32, #tpu.memory_space<vmem>>, vector<8x128xf32>
    tpu.vector_store %arg6[%c0_6, %c0_7], %7 {strides = array<i32>} : memref<8x128xf32, #tpu.memory_space<vmem>>, vector<8x128xf32>,
    return
  }
  func.func @transform_0(%arg0: i32, %arg1: i32, %arg2: i32) -> (i32, i32) {
    %c0_i32 = arith.constant 0 : i32
    return %arg0, %arg2 : i32, i32
  }
  func.func @transform_1(%arg0: i32, %arg1: i32, %arg2: i32) -> (i32, i32) {
    %c0_i32 = arith.constant 0 : i32
    return %arg1, %arg2 : i32, i32
  }
  func.func @transform_2(%arg0: i32, %arg1: i32, %arg2: i32) -> (i32, i32) {
    %c0_i32 = arith.constant 0 : i32
    %c0_i32_0 = arith.constant 0 : i32
    return %c0_i32, %arg1 : i32, i32
  }
  func.func @transform_3(%arg0: i32, %arg1: i32, %arg2: i32) -> (i32, i32) {
    %c0_i32 = arith.constant 0 : i32
    return %arg0, %arg1 : i32, i32
  }
}

</mosaic_0001>

<llo_original>
// kernel: linear_block.1
$region0: #{linear_block.1}
  #allocation0 [shape = 'u32[]', space=smem, size = 0x4, offset = 0x4, fixed_abs, tag = 'smem constant byte address 0x4 - core index']
  #allocation1 [shape = 'u32[72,128]{1,0:T(1,128)}', space=vmem, size = 0x9000, scoped, tag = 'internal scratch']
  %s0 = inlined_call_operand.vmem [shape: f32[8,128], index: 0, kind: input, shape index: {}]
  %s1 = inlined_call_operand.vmem [shape: f32[128,128], index: 1, kind: input, shape index: {}]
  %s2 = inlined_call_operand.vmem [shape: f32[1,128], index: 2, kind: input, shape index: {}]
  %s3 = inlined_call_operand.hbm [shape: f32[8,128], index: 3, kind: output, shape index: {}]
  %s4 = sld [smem:[#allocation0]]
  $region22: #{linear_block.1} parent=0
    _
  %s6 = ssub.s32 1, %s4
  %s7 = scalar_select 0, %s6, %s4
  $region1: #{linear_block.1} parent=0
    #allocation2 [shape = 'u8[4096]{0}', space=vmem, size = 0x1000, scoped, tag = 'output window, operand 0, single buffered']
    #allocation3 [shape = 's32[1]{0}', space=sflag, size = 0x4, scoped, tag = 'scoped memory for linear_block.1']
    %8 = vsyncpa [#allocation3], 0
    // Predicated region
    $region2: #{linear_block.1} parent=1 // pred_check
      _
    $region3: #{linear_block.1} parent=1 // pred_check_branch
      %10 = sbr.rel (0) target = $region5
    $region4: #{linear_block.1} parent=1 // pred_region
      _
    $region5: #{linear_block.1} parent=1 // pred_fallthru
      _
    // Predicated region
    $region6: #{linear_block.1} parent=1 // pred_check
      _
    $region7: #{linear_block.1} parent=1 // pred_check_branch
      %12 = sbr.rel (0) target = $region9
    $region8: #{linear_block.1} parent=1 // pred_region
      _
    $region9: #{linear_block.1} parent=1 // pred_fallthru
      _
    // Predicated region
    $region10: #{linear_block.1} parent=1 // pred_check
      _
    $region11: #{linear_block.1} parent=1 // pred_check_branch
      %14 = sbr.rel (0) target = $region13
    $region12: #{linear_block.1} parent=1 // pred_region
      _
    $region13: #{linear_block.1} parent=1 // pred_fallthru
      _
    %v15 = vld [vmem:[%s0] sm:$0xff]
    %v16 = vld [vmem:[%s1] sm:$0xff]
    %v17 = vld [vmem:[%s1 + $0x8] sm:$0xff]
    %v18 = vld [vmem:[%s1 + $0x10] sm:$0xff]
    %v19 = vld [vmem:[%s1 + $0x18] sm:$0xff]
    %v20 = vld [vmem:[%s1 + $0x20] sm:$0xff]
    %v21 = vld [vmem:[%s1 + $0x28] sm:$0xff]
    %v22 = vld [vmem:[%s1 + $0x30] sm:$0xff]
    %v23 = vld [vmem:[%s1 + $0x38] sm:$0xff]
    %v24 = vld [vmem:[%s1 + $0x40] sm:$0xff]
    %v25 = vld [vmem:[%s1 + $0x48] sm:$0xff]
    %v26 = vld [vmem:[%s1 + $0x50] sm:$0xff]
    %v27 = vld [vmem:[%s1 + $0x58] sm:$0xff]
    %v28 = vld [vmem:[%s1 + $0x60] sm:$0xff]
    %v29 = vld [vmem:[%s1 + $0x68] sm:$0xff]
    %v30 = vld [vmem:[%s1 + $0x70] sm:$0xff]
    %v31 = vld [vmem:[%s1 + $0x78] sm:$0xff]
    %v32 = vld [vmem:[%s2] sm:$0x1]
    %v34 = vperm.slane %v32, 0
    %36 = vmatpush.xpose.msra.mxu0 %v31
    %37 = vmatpush.xpose.msra.mxu0 %v30
    %38 = vmatpush.xpose.msra.mxu0 %v29
    %39 = vmatpush.xpose.msra.mxu0 %v28
    %40 = vmatpush.xpose.msra.mxu0 %v27
    %41 = vmatpush.xpose.msra.mxu0 %v26
    %42 = vmatpush.xpose.msra.mxu0 %v25
    %43 = vmatpush.xpose.msra.mxu0 %v24
    %44 = vmatpush.xpose.msra.mxu0 %v23
    %45 = vmatpush.xpose.msra.mxu0 %v22
    %46 = vmatpush.xpose.msra.mxu0 %v21
    %47 = vmatpush.xpose.msra.mxu0 %v20
    %48 = vmatpush.xpose.msra.mxu0 %v19
    %49 = vmatpush.xpose.msra.mxu0 %v18
    %50 = vmatpush.xpose.msra.mxu0 %v17
    %51 = vmatpush.xpose.msra.mxu0 %v16
    %52 = vmatmul.f32.gmra.mxu0 %v15
    %v53 = vpop.f32.mrf.mxu0
    %v54 = vadd.f32 %v34, %v53
    %55 = vdwg.mxu0
    %v56 = vmax.f32 %v54, 0.0
    %57 = vst [vmem:[#allocation2] sm:$0xff] %v56
    // Predicated region
    $region14: #{linear_block.1} parent=1 // pred_check
      _
    $region15: #{linear_block.1} parent=1 // pred_check_branch
      %59 = sbr.rel (0) target = $region17
    $region16: #{linear_block.1} parent=1 // pred_region
      %61 = vsyncadd [#allocation3], 0
      %s63 = sshll.u32 [#allocation2], 4
      %s64 = int_to_ptr.vmem [resolvable:$true] %s63
      %s65 = sshll.u32 %s3, 4
      %s66 = int_to_ptr.hbm [resolvable:$true] %s65
      %68 = dma.vmem_to_hbm [thread:$0]  %s64, 128, %s66, [#allocation3]
    $region17: #{linear_block.1} parent=1 // pred_fallthru
      _
    // Predicated region
    $region18: #{linear_block.1} parent=1 // pred_check
      _
    $region19: #{linear_block.1} parent=1 // pred_check_branch
      %70 = sbr.rel (0) target = $region21
    $region20: #{linear_block.1} parent=1 // pred_region
      %72 = dma.done [#allocation3], 128
    $region21: #{linear_block.1} parent=1 // pred_fallthru
      _
    %73 = vsyncpa [#allocation3], 1

</llo_original>
